<compile_context>
chip_gen: v6e
topology: v6e:2x2x1
jax: 0.10.0
libtpu: 0.0.40
codegen_flags: <defaults>
</compile_context>

<pallas_src>
import numpy as np
import jax
import jax.numpy as jnp
from jax.experimental import pallas as pl
from jax.experimental.pallas import tpu as pltpu


# ----------------------------------------------------------------------------
# MADE mask construction (natural ordering, single deterministic mask).
# Masks are [in_features, out_features], matching the transposed weight layout.
# ----------------------------------------------------------------------------
def build_made_masks(nin, hidden_sizes, nout):
    # TODO(synk): MADE uses a seeded rng.randint for hidden degrees; we use the
    # deterministic `arange(h) % (nin-1)` variant. The autoregressive property
    # holds either way, but weight-for-weight parity with a torch checkpoint
    # requires the same degree assignment.
    assert nout % nin == 0, "MADE output mask tiling requires nout % nin == 0"
    m = {}
    m[-1] = np.arange(nin)
    for l, h in enumerate(hidden_sizes):
        m[l] = np.arange(h) % max(1, nin - 1)
    L = len(hidden_sizes)
    masks = [(m[l - 1][:, None] <= m[l][None, :]).astype(np.float32) for l in range(L)]
    masks.append((m[L - 1][:, None] < m[-1][None, :]).astype(np.float32))
    if nout > nin:
        k = nout // nin
        masks[-1] = np.concatenate([masks[-1]] * k, axis=1)
    return masks  # list of [in, out] float masks


# ----------------------------------------------------------------------------
# One-time parameter prep: fold masks (fp32), fuse cond projection into layer 1,
# block-diagonally replicate every layer PACK times (batch lane-packing), tile
# the biases to match, cast weights to bf16.
# ----------------------------------------------------------------------------
def _block_diag_tile(w, pack):
    a, b = w.shape
    out = jnp.zeros((pack * a, pack * b), w.dtype)
    for i in range(pack):
        out = out.at[i * a:(i + 1) * a, i * b:(i + 1) * b].set(w)
    return out


def fold_params(params, masks, nout, pack=8):
    w1m = params["w1"] * masks[0]                               # fp32 mask fold
    w1c = jnp.concatenate([w1m, params["wc"]], axis=0)          # [nin+con_dim, nh]
    # TODO(synk): some conditional-MADE variants build the cond Linear with
    # bias=False; here both biases exist and are folded into one.
    b1c = params["b1"] + params["bc"]                           # [1, nh] fp32
    w2m = params["w2"] * masks[1]
    w3m = params["w3"] * masks[2]
    w4m = params["w4"] * masks[3]                               # [nh, nout]

    bf = lambda a: a.astype(jnp.bfloat16)
    bd = lambda w: bf(_block_diag_tile(w, pack))                # packed bf16 weights
    tb = lambda b: jnp.tile(b, (1, pack))                       # packed fp32 biases

    return dict(
        w1=bd(w1c), b1=tb(b1c),
        w2=bd(w2m), b2=tb(params["b2"]),
        w3=bd(w3m), b3=tb(params["b3"]),
        w4=bd(w4m), b4=tb(params["b4"]),
        pack=pack, nout=nout, k1=w1c.shape[0], nh=w2m.shape[0],
    )


# ----------------------------------------------------------------------------
# Pallas kernel: 4 masked matmuls (masks pre-folded, batch lane-packed) + ReLUs,
# bf16 operands / f32 MXU accumulation.  All weights/biases VMEM-resident
# (constant index_maps); one packed batch tile per grid step.
# ----------------------------------------------------------------------------
def made_cond_kernel(xc_ref,
                     w1_ref, b1_ref,
                     w2_ref, b2_ref,
                     w3_ref, b3_ref,
                     w4_ref, b4_ref,
                     out_ref):
    # layer 1 (masked W1 + cond projection fused/stacked, block-diag packed)
    h = jnp.dot(xc_ref[...], w1_ref[...], preferred_element_type=jnp.float32)
    h = jnp.maximum(h + b1_ref[...], 0.0)

    # layer 2
    h = jnp.dot(h.astype(jnp.bfloat16), w2_ref[...], preferred_element_type=jnp.float32)
    h = jnp.maximum(h + b2_ref[...], 0.0)

    # layer 3
    h = jnp.dot(h.astype(jnp.bfloat16), w3_ref[...], preferred_element_type=jnp.float32)
    h = jnp.maximum(h + b3_ref[...], 0.0)

    # output layer (exactly pack*nout lanes -> lane-dense unmasked store)
    out = jnp.dot(h.astype(jnp.bfloat16), w4_ref[...], preferred_element_type=jnp.float32)
    out_ref[...] = out + b4_ref[...]


def _default_num_tiles():
    # v5e/v6e have one TensorCore: a single grid step avoids ~0.35 us/step
    # overhead.  v7x has two TensorCores: give each a "parallel" batch shard.
    try:
        kind = jax.devices()[0].device_kind.lower()
        if "v7" in kind:
            return 2
    except Exception:
        pass
    return 1


def armlp_conditional_forward(x, con_in, folded, *, n_tiles=None):
    """x: [B, nin], con_in: [B, con_dim] -> [B, nout]."""
    B = x.shape[0]
    pack, nout = folded["pack"], folded["nout"]
    k1p = folded["w1"].shape[0]       # pack * (nin + con_dim)
    nhp = folded["w2"].shape[0]       # pack * nh
    noutp = folded["w4"].shape[1]     # pack * nout

    if n_tiles is None:
        n_tiles = _default_num_tiles()

    # packed-row tiling: tbp packed rows per grid step, sublane-aligned (x8)
    packed_rows = -(-B // pack)
    tbp = -(-packed_rows // n_tiles)
    tbp = max(8, ((tbp + 7) // 8) * 8)
    n_tiles = -(-packed_rows // tbp)
    bp = n_tiles * tbp * pack          # padded batch rows

    # concat + pad + pack-reshape + bf16 cast: one fusable producer of xc.
    xc = jnp.concatenate([x, con_in], axis=1)
    if bp != B:
        xc = jnp.pad(xc, ((0, bp - B), (0, 0)))
    xc = xc.reshape(n_tiles * tbp, k1p).astype(jnp.bfloat16)   # free row-major pack

    const2 = lambda i: (0, 0)

    rows = n_tiles * tbp
    flops = 2 * rows * (k1p * nhp + 2 * nhp * nhp + nhp * noutp)
    bytes_accessed = (
        rows * k1p * 2 + rows * noutp * 4
        + sum(int(folded[k].size) * 2 for k in ("w1", "w2", "w3", "w4"))
        + sum(int(folded[k].size) * 4 for k in ("b1", "b2", "b3", "b4"))
    )

    out_packed = pl.pallas_call(
        made_cond_kernel,
        out_shape=jax.ShapeDtypeStruct((rows, noutp), jnp.float32),
        grid_spec=pltpu.PrefetchScalarGridSpec(
            num_scalar_prefetch=0,
            grid=(n_tiles,),
            in_specs=[
                pl.BlockSpec((tbp, k1p), lambda i: (i, 0)),      # streamed packed activations
                pl.BlockSpec((k1p, nhp), const2),                # resident weights / biases
                pl.BlockSpec((1, nhp), const2),
                pl.BlockSpec((nhp, nhp), const2),
                pl.BlockSpec((1, nhp), const2),
                pl.BlockSpec((nhp, nhp), const2),
                pl.BlockSpec((1, nhp), const2),
                pl.BlockSpec((nhp, noutp), const2),
                pl.BlockSpec((1, noutp), const2),
            ],
            out_specs=pl.BlockSpec((tbp, noutp), lambda i: (i, 0)),
        ),
        compiler_params=pltpu.CompilerParams(
            dimension_semantics=("parallel",),          # megacore batch sharding (v7x)
            vmem_limit_bytes=32 * 1024 * 1024,          # safe on v5e/v6e/v7x
        ),
        cost_estimate=pl.CostEstimate(
            flops=flops, transcendentals=0, bytes_accessed=bytes_accessed),
    )(xc, folded["w1"], folded["b1"], folded["w2"], folded["b2"],
      folded["w3"], folded["b3"], folded["w4"], folded["b4"])

    # free row-major un-pack, then a tiny row slice for any batch padding
    return out_packed.reshape(bp, nout)[:B]


# ----------------------------------------------------------------------------
# Deterministic parameter init (PyTorch-Linear-style uniform init), weights
# stored transposed as [in, out].
# ----------------------------------------------------------------------------
def init_params(key, nin, nh, nout, con_dim):
    def linear(key, fan_in, fan_out):
        kw, kb = jax.random.split(key)
        bound = 1.0 / np.sqrt(fan_in)
        w = jax.random.uniform(kw, (fan_in, fan_out), jnp.float32, -bound, bound)
        b = jax.random.uniform(kb, (1, fan_out), jnp.float32, -bound, bound)
        return w, b

    k1, k2, k3, k4, kc = jax.random.split(key, 5)
    w1, b1 = linear(k1, nin, nh)
    w2, b2 = linear(k2, nh, nh)
    w3, b3 = linear(k3, nh, nh)
    w4, b4 = linear(k4, nh, nout)
    wc, bc = linear(kc, con_dim, nh)
    return dict(w1=w1, b1=b1, w2=w2, b2=b2, w3=w3, b3=b3, w4=w4, b4=b4, wc=wc, bc=bc)


# bf16-consistent reference (same precision policy as the kernel, un-packed math)
def reference_forward_bf16(x, con_in, params, masks):
    bf = lambda a: a.astype(jnp.bfloat16)
    xc = jnp.concatenate([x, con_in], axis=1).astype(jnp.bfloat16)
    w1 = bf(jnp.concatenate([params["w1"] * masks[0], params["wc"]], axis=0))
    h = jnp.dot(xc, w1, preferred_element_type=jnp.float32) + (params["b1"] + params["bc"])
    h = jnp.maximum(h, 0.0)
    h = jnp.dot(h.astype(jnp.bfloat16), bf(params["w2"] * masks[1]),
                preferred_element_type=jnp.float32) + params["b2"]
    h = jnp.maximum(h, 0.0)
    h = jnp.dot(h.astype(jnp.bfloat16), bf(params["w3"] * masks[2]),
                preferred_element_type=jnp.float32) + params["b3"]
    h = jnp.maximum(h, 0.0)
    return jnp.dot(h.astype(jnp.bfloat16), bf(params["w4"] * masks[3]),
                   preferred_element_type=jnp.float32) + params["b4"]


# fp32 reference of the original module semantics (loose sanity check)
def reference_forward_fp32(x, con_in, params, masks):
    h = x @ (params["w1"] * masks[0]) + params["b1"]
    h = h + con_in @ params["wc"] + params["bc"]
    h = jnp.maximum(h, 0.0)
    h = jnp.maximum(h @ (params["w2"] * masks[1]) + params["b2"], 0.0)
    h = jnp.maximum(h @ (params["w3"] * masks[2]) + params["b3"], 0.0)
    return h @ (params["w4"] * masks[3]) + params["b4"]


if __name__ == "__main__":
    # shapes: batch=512, nin=8, nh=32, con_dim=8, nout=2*nin=16
    # (big_hidden=True -> 3 hidden layers).  With PACK=8 the packed activations
    # are [64, 128] and the packed output is [64, 128] — fully lane-dense.
    B, nin, nh, con_dim = 512, 8, 32, 8
    nout = 2 * nin
    hidden_sizes = [nh, nh, nh]

    key = jax.random.PRNGKey(0)
    kx, kc, kp = jax.random.split(key, 3)
    x = jax.random.normal(kx, (B, nin), jnp.float32)
    con_in = jax.random.normal(kc, (B, con_dim), jnp.float32)

    params = init_params(kp, nin, nh, nout, con_dim)
    masks = [jnp.asarray(m) for m in build_made_masks(nin, hidden_sizes, nout)]
    folded = fold_params(params, masks, nout, pack=8)   # one-time host-side prep

    out = armlp_conditional_forward(x, con_in, folded)
    out = jax.block_until_ready(out)
    assert out.shape == (B, nout)

    # tight check against bf16-consistent reference
    ref_bf16 = reference_forward_bf16(x, con_in, params, masks)
    assert np.allclose(np.asarray(out), np.asarray(ref_bf16), atol=2e-3, rtol=2e-3)

    # loose sanity check against original fp32 semantics
    ref_fp32 = reference_forward_fp32(x, con_in, params, masks)
    assert np.allclose(np.asarray(out), np.asarray(ref_fp32), atol=1e-1, rtol=1e-1)

    # padding path: batch not a multiple of PACK / tile rows
    B2 = 100
    x2 = jax.random.normal(jax.random.PRNGKey(1), (B2, nin), jnp.float32)
    c2 = jax.random.normal(jax.random.PRNGKey(2), (B2, con_dim), jnp.float32)
    out2 = jax.block_until_ready(armlp_conditional_forward(x2, c2, folded))
    ref2 = reference_forward_bf16(x2, c2, params, masks)
    assert out2.shape == (B2, nout)
    assert np.allclose(np.asarray(out2), np.asarray(ref2), atol=2e-3, rtol=2e-3)

    print("KERNEL_OK")
</pallas_src>

<mosaic_0001>
module attributes {stable_mosaic.version = 11 : i64} {
  func.func @made_cond_kernel(%arg0: i32, %arg1: memref<64x128xbf16, #tpu.memory_space<vmem>>, %arg2: memref<128x256xbf16, #tpu.memory_space<vmem>>, %arg3: memref<1x256xf32, #tpu.memory_space<vmem>>, %arg4: memref<256x256xbf16, #tpu.memory_space<vmem>>, %arg5: memref<1x256xf32, #tpu.memory_space<vmem>>, %arg6: memref<256x256xbf16, #tpu.memory_space<vmem>>, %arg7: memref<1x256xf32, #tpu.memory_space<vmem>>, %arg8: memref<256x128xbf16, #tpu.memory_space<vmem>>, %arg9: memref<1x128xf32, #tpu.memory_space<vmem>>, %arg10: memref<64x128xf32, #tpu.memory_space<vmem>>) attributes {dimension_semantics = [#tpu.dimension_semantics<parallel>], iteration_bounds = array<i64: 1>, scalar_prefetch = 0 : i64, scratch_operands = 0 : i64, tpu.core_type = #tpu.core_type<tc>, window_params = [{transform_indices = @transform_0, window_bounds = array<i64: 64, 128>}, {pipeline_mode = #tpu.pipeline_mode<synchronous>, transform_indices = @transform_1, window_bounds = array<i64: 128, 256>}, {pipeline_mode = #tpu.pipeline_mode<synchronous>, transform_indices = @transform_2, window_bounds = array<i64: 1, 256>}, {pipeline_mode = #tpu.pipeline_mode<synchronous>, transform_indices = @transform_3, window_bounds = array<i64: 256, 256>}, {pipeline_mode = #tpu.pipeline_mode<synchronous>, transform_indices = @transform_4, window_bounds = array<i64: 1, 256>}, {pipeline_mode = #tpu.pipeline_mode<synchronous>, transform_indices = @transform_5, window_bounds = array<i64: 256, 256>}, {pipeline_mode = #tpu.pipeline_mode<synchronous>, transform_indices = @transform_6, window_bounds = array<i64: 1, 256>}, {pipeline_mode = #tpu.pipeline_mode<synchronous>, transform_indices = @transform_7, window_bounds = array<i64: 256, 128>}, {pipeline_mode = #tpu.pipeline_mode<synchronous>, transform_indices = @transform_8, window_bounds = array<i64: 1, 128>}, {transform_indices = @transform_9, window_bounds = array<i64: 64, 128>}]} {
    %c0 = arith.constant 0 : index
    %c0_0 = arith.constant 0 : index
    %0 = vector.load %arg1[%c0, %c0_0] : memref<64x128xbf16, #tpu.memory_space<vmem>>, vector<64x128xbf16>
    %c0_1 = arith.constant 0 : index
    %c0_2 = arith.constant 0 : index
    %1 = vector.load %arg2[%c0_1, %c0_2] : memref<128x256xbf16, #tpu.memory_space<vmem>>, vector<128x256xbf16>
    %cst = arith.constant dense<0.000000e+00> : vector<64x256xf32>
    %2 = tpu.matmul %0, %1, %cst {dimension_numbers = #tpu.dot_dimension_numbers<[1], [0], [0], [1], [0, 0, 1, 1], [], []>} : vector<64x128xbf16>, vector<128x256xbf16>, vector<64x256xf32> -> vector<64x256xf32>
    %c0_3 = arith.constant 0 : index
    %c0_4 = arith.constant 0 : index
    %3 = vector.load %arg3[%c0_3, %c0_4] : memref<1x256xf32, #tpu.memory_space<vmem>>, vector<1x256xf32>
    %4 = vector.broadcast %3 : vector<1x256xf32> to vector<64x256xf32>
    %5 = arith.addf %2, %4 : vector<64x256xf32>
    %cst_5 = arith.constant 0.000000e+00 : f32
    %6 = vector.broadcast %cst_5 : f32 to vector<64x256xf32>
    %7 = arith.maximumf %5, %6 : vector<64x256xf32>
    %8 = arith.truncf %7 : vector<64x256xf32> to vector<64x256xbf16>
    %c0_6 = arith.constant 0 : index
    %c0_7 = arith.constant 0 : index
    %9 = vector.load %arg4[%c0_6, %c0_7] : memref<256x256xbf16, #tpu.memory_space<vmem>>, vector<256x256xbf16>
    %cst_8 = arith.constant dense<0.000000e+00> : vector<64x256xf32>
    %10 = tpu.matmul %8, %9, %cst_8 {dimension_numbers = #tpu.dot_dimension_numbers<[1], [0], [0], [1], [0, 0, 1, 1], [], []>} : vector<64x256xbf16>, vector<256x256xbf16>, vector<64x256xf32> -> vector<64x256xf32>
    %c0_9 = arith.constant 0 : index
    %c0_10 = arith.constant 0 : index
    %11 = vector.load %arg5[%c0_9, %c0_10] : memref<1x256xf32, #tpu.memory_space<vmem>>, vector<1x256xf32>
    %12 = vector.broadcast %11 : vector<1x256xf32> to vector<64x256xf32>
    %13 = arith.addf %10, %12 : vector<64x256xf32>
    %cst_11 = arith.constant 0.000000e+00 : f32
    %14 = vector.broadcast %cst_11 : f32 to vector<64x256xf32>
    %15 = arith.maximumf %13, %14 : vector<64x256xf32>
    %16 = arith.truncf %15 : vector<64x256xf32> to vector<64x256xbf16>
    %c0_12 = arith.constant 0 : index
    %c0_13 = arith.constant 0 : index
    %17 = vector.load %arg6[%c0_12, %c0_13] : memref<256x256xbf16, #tpu.memory_space<vmem>>, vector<256x256xbf16>
    %cst_14 = arith.constant dense<0.000000e+00> : vector<64x256xf32>
    %18 = tpu.matmul %16, %17, %cst_14 {dimension_numbers = #tpu.dot_dimension_numbers<[1], [0], [0], [1], [0, 0, 1, 1], [], []>} : vector<64x256xbf16>, vector<256x256xbf16>, vector<64x256xf32> -> vector<64x256xf32>
    %c0_15 = arith.constant 0 : index
    %c0_16 = arith.constant 0 : index
    %19 = vector.load %arg7[%c0_15, %c0_16] : memref<1x256xf32, #tpu.memory_space<vmem>>, vector<1x256xf32>
    %20 = vector.broadcast %19 : vector<1x256xf32> to vector<64x256xf32>
    %21 = arith.addf %18, %20 : vector<64x256xf32>
    %cst_17 = arith.constant 0.000000e+00 : f32
    %22 = vector.broadcast %cst_17 : f32 to vector<64x256xf32>
    %23 = arith.maximumf %21, %22 : vector<64x256xf32>
    %24 = arith.truncf %23 : vector<64x256xf32> to vector<64x256xbf16>
    %c0_18 = arith.constant 0 : index
    %c0_19 = arith.constant 0 : index
    %25 = vector.load %arg8[%c0_18, %c0_19] : memref<256x128xbf16, #tpu.memory_space<vmem>>, vector<256x128xbf16>
    %cst_20 = arith.constant dense<0.000000e+00> : vector<64x128xf32>
    %26 = tpu.matmul %24, %25, %cst_20 {dimension_numbers = #tpu.dot_dimension_numbers<[1], [0], [0], [1], [0, 0, 1, 1], [], []>} : vector<64x256xbf16>, vector<256x128xbf16>, vector<64x128xf32> -> vector<64x128xf32>
    %c0_21 = arith.constant 0 : index
    %c0_22 = arith.constant 0 : index
    %27 = vector.load %arg9[%c0_21, %c0_22] : memref<1x128xf32, #tpu.memory_space<vmem>>, vector<1x128xf32>
    %28 = vector.broadcast %27 : vector<1x128xf32> to vector<64x128xf32>
    %29 = arith.addf %26, %28 : vector<64x128xf32>
    %c0_23 = arith.constant 0 : index
    %c0_24 = arith.constant 0 : index
    %30 = vector.load %arg10[%c0_23, %c0_24] : memref<64x128xf32, #tpu.memory_space<vmem>>, vector<64x128xf32>
    tpu.vector_store %arg10[%c0_23, %c0_24], %29 {strides = array<i32>} : memref<64x128xf32, #tpu.memory_space<vmem>>, vector<64x128xf32>,
    return
  }
  func.func @transform_0(%arg0: i32) -> (i32, i32) {
    %c0_i32 = arith.constant 0 : i32
    %c0_i32_0 = arith.constant 0 : i32
    return %arg0, %c0_i32 : i32, i32
  }
  func.func @transform_1(%arg0: i32) -> (i32, i32) {
    %c0_i32 = arith.constant 0 : i32
    %c0_i32_0 = arith.constant 0 : i32
    %c0_i32_1 = arith.constant 0 : i32
    return %c0_i32, %c0_i32_0 : i32, i32
  }
  func.func @transform_2(%arg0: i32) -> (i32, i32) {
    %c0_i32 = arith.constant 0 : i32
    %c0_i32_0 = arith.constant 0 : i32
    %c0_i32_1 = arith.constant 0 : i32
    return %c0_i32, %c0_i32_0 : i32, i32
  }
  func.func @transform_3(%arg0: i32) -> (i32, i32) {
    %c0_i32 = arith.constant 0 : i32
    %c0_i32_0 = arith.constant 0 : i32
    %c0_i32_1 = arith.constant 0 : i32
    return %c0_i32, %c0_i32_0 : i32, i32
  }
  func.func @transform_4(%arg0: i32) -> (i32, i32) {
    %c0_i32 = arith.constant 0 : i32
    %c0_i32_0 = arith.constant 0 : i32
    %c0_i32_1 = arith.constant 0 : i32
    return %c0_i32, %c0_i32_0 : i32, i32
  }
  func.func @transform_5(%arg0: i32) -> (i32, i32) {
    %c0_i32 = arith.constant 0 : i32
    %c0_i32_0 = arith.constant 0 : i32
    %c0_i32_1 = arith.constant 0 : i32
    return %c0_i32, %c0_i32_0 : i32, i32
  }
  func.func @transform_6(%arg0: i32) -> (i32, i32) {
    %c0_i32 = arith.constant 0 : i32
    %c0_i32_0 = arith.constant 0 : i32
    %c0_i32_1 = arith.constant 0 : i32
    return %c0_i32, %c0_i32_0 : i32, i32
  }
  func.func @transform_7(%arg0: i32) -> (i32, i32) {
    %c0_i32 = arith.constant 0 : i32
    %c0_i32_0 = arith.constant 0 : i32
    %c0_i32_1 = arith.constant 0 : i32
    return %c0_i32, %c0_i32_0 : i32, i32
  }
  func.func @transform_8(%arg0: i32) -> (i32, i32) {
    %c0_i32 = arith.constant 0 : i32
    %c0_i32_0 = arith.constant 0 : i32
    %c0_i32_1 = arith.constant 0 : i32
    return %c0_i32, %c0_i32_0 : i32, i32
  }
  func.func @transform_9(%arg0: i32) -> (i32, i32) {
    %c0_i32 = arith.constant 0 : i32
    %c0_i32_0 = arith.constant 0 : i32
    return %arg0, %c0_i32 : i32, i32
  }
}

</mosaic_0001>

<llo_original>
// kernel: tpu_custom_call.1
$region0: #{tpu_custom_call.1}
  #allocation0 [shape = 'u32[]', space=smem, size = 0x4, offset = 0x4, fixed_abs, tag = 'smem constant byte address 0x4 - core index']
  #allocation1 [shape = 'u32[144,128]{1,0:T(1,128)}', space=vmem, size = 0x12000, scoped, tag = 'internal scratch']
  %s0 = inlined_call_operand.hbm [shape: bf16[64,128], index: 0, kind: input, shape index: {}]
  %s1 = inlined_call_operand.hbm [shape: bf16[128,256], index: 1, kind: input, shape index: {}]
  %s2 = inlined_call_operand.vmem [shape: f32[1,256], index: 2, kind: input, shape index: {}]
  %s3 = inlined_call_operand.hbm [shape: bf16[256,256], index: 3, kind: input, shape index: {}]
  %s4 = inlined_call_operand.vmem [shape: f32[1,256], index: 4, kind: input, shape index: {}]
  %s5 = inlined_call_operand.hbm [shape: bf16[256,256], index: 5, kind: input, shape index: {}]
  %s6 = inlined_call_operand.vmem [shape: f32[1,256], index: 6, kind: input, shape index: {}]
  %s7 = inlined_call_operand.hbm [shape: bf16[256,128], index: 7, kind: input, shape index: {}]
  %s8 = inlined_call_operand.vmem [shape: f32[1,128], index: 8, kind: input, shape index: {}]
  %s9 = inlined_call_operand.hbm [shape: f32[64,128], index: 9, kind: output, shape index: {}]
  %s10 = sld [smem:[#allocation0]]
  $region66: #{tpu_custom_call.1} parent=0
    _
  %s12 = ssub.s32 1, %s10
  %s13 = scalar_select 0, %s12, %s10
  $region1: #{tpu_custom_call.1} parent=0
    #allocation2 [shape = 'u8[16384]{0}', space=vmem, size = 0x4000, scoped, tag = 'input window, operand 0, single buffered']
    #allocation3 [shape = 's32[1]{0}', space=sflag, size = 0x4, scoped, tag = 'scoped memory for tpu_custom_call.1']
    #allocation4 [shape = 's32[1]{0}', space=sflag, size = 0x4, scoped, tag = 'scoped memory for tpu_custom_call.1']
    #allocation5 [shape = 'u8[65536]{0}', space=vmem, size = 0x10000, scoped, tag = 'input window, operand 1, single buffered']
    #allocation6 [shape = 's32[1]{0}', space=sflag, size = 0x4, scoped, tag = 'scoped memory for tpu_custom_call.1']
    #allocation7 [shape = 'u8[131072]{0}', space=vmem, size = 0x20000, scoped, tag = 'input window, operand 3, single buffered']
    #allocation8 [shape = 'u8[131072]{0}', space=vmem, size = 0x20000, scoped, tag = 'input window, operand 5, single buffered']
    #allocation9 [shape = 's32[1]{0}', space=sflag, size = 0x4, scoped, tag = 'scoped memory for tpu_custom_call.1']
    #allocation10 [shape = 'u8[65536]{0}', space=vmem, size = 0x10000, scoped, tag = 'input window, operand 7, single buffered']
    #allocation11 [shape = 'u8[32768]{0}', space=vmem, size = 0x8000, scoped, tag = 'output window, operand 0, single buffered']
    %14 = vsyncpa [#allocation3], 0
    %15 = vsyncpa [#allocation6], 0
    %16 = vsyncpa [#allocation9], 0
    %17 = vsyncpa [#allocation4], 0
    // Predicated region
    $region2: #{tpu_custom_call.1} parent=1 // pred_check
      _
    $region3: #{tpu_custom_call.1} parent=1 // pred_check_branch
      %19 = sbr.rel (0) target = $region5
    $region4: #{tpu_custom_call.1} parent=1 // pred_region
      %s21 = ssub.s32 512, 512
      %22 = vsyncadd [#allocation3], %s21
      %s23 = sshll.u32 [#allocation2], 4
      %s24 = int_to_ptr.vmem [resolvable:$true] %s23
      %29 = dma.hbm_to_vmem [thread:$0]  %s0, 512, %s24, [#allocation3], 64, 64, 4
    $region5: #{tpu_custom_call.1} parent=1 // pred_fallthru
      _
    // Predicated region
    $region6: #{tpu_custom_call.1} parent=1 // pred_check
      _
    $region7: #{tpu_custom_call.1} parent=1 // pred_check_branch
      %31 = sbr.rel (0) target = $region9
    $region8: #{tpu_custom_call.1} parent=1 // pred_region
      %s33 = ssub.s32 2048, 2048
      %34 = vsyncadd [#allocation6], %s33
      %s35 = sshll.u32 [#allocation5], 4
      %s36 = int_to_ptr.vmem [resolvable:$true] %s35
      %41 = dma.hbm_to_vmem [thread:$0]  %s1, 2048, %s36, [#allocation6], 128, 128, 8
    $region9: #{tpu_custom_call.1} parent=1 // pred_fallthru
      _
    // Predicated region
    $region10: #{tpu_custom_call.1} parent=1 // pred_check
      _
    $region11: #{tpu_custom_call.1} parent=1 // pred_check_branch
      %43 = sbr.rel (0) target = $region13
    $region12: #{tpu_custom_call.1} parent=1 // pred_region
      _
    $region13: #{tpu_custom_call.1} parent=1 // pred_fallthru
      _
    // Predicated region
    $region14: #{tpu_custom_call.1} parent=1 // pred_check
      _
    $region15: #{tpu_custom_call.1} parent=1 // pred_check_branch
      %45 = sbr.rel (0) target = $region17
    $region16: #{tpu_custom_call.1} parent=1 // pred_region
      %s47 = ssub.s32 4096, 4096
      %48 = vsyncadd [#allocation6], %s47
      %s49 = sshll.u32 [#allocation7], 4
      %s50 = int_to_ptr.vmem [resolvable:$true] %s49
      %55 = dma.hbm_to_vmem [thread:$0]  %s3, 4096, %s50, [#allocation6], 128, 128, 8
    $region17: #{tpu_custom_call.1} parent=1 // pred_fallthru
      _
    // Predicated region
    $region18: #{tpu_custom_call.1} parent=1 // pred_check
      _
    $region19: #{tpu_custom_call.1} parent=1 // pred_check_branch
      %57 = sbr.rel (0) target = $region21
    $region20: #{tpu_custom_call.1} parent=1 // pred_region
      _
    $region21: #{tpu_custom_call.1} parent=1 // pred_fallthru
      _
    // Predicated region
    $region22: #{tpu_custom_call.1} parent=1 // pred_check
      _
    $region23: #{tpu_custom_call.1} parent=1 // pred_check_branch
      %59 = sbr.rel (0) target = $region25
    $region24: #{tpu_custom_call.1} parent=1 // pred_region
      %s61 = ssub.s32 4096, 4096
      %62 = vsyncadd [#allocation9], %s61
      %s63 = sshll.u32 [#allocation8], 4
      %s64 = int_to_ptr.vmem [resolvable:$true] %s63
      %69 = dma.hbm_to_vmem [thread:$0]  %s5, 4096, %s64, [#allocation9], 128, 128, 8
    $region25: #{tpu_custom_call.1} parent=1 // pred_fallthru
      _
    // Predicated region
    $region26: #{tpu_custom_call.1} parent=1 // pred_check
      _
    $region27: #{tpu_custom_call.1} parent=1 // pred_check_branch
      %71 = sbr.rel (0) target = $region29
    $region28: #{tpu_custom_call.1} parent=1 // pred_region
      _
    $region29: #{tpu_custom_call.1} parent=1 // pred_fallthru
      _
    // Predicated region
    $region30: #{tpu_custom_call.1} parent=1 // pred_check
      _
    $region31: #{tpu_custom_call.1} parent=1 // pred_check_branch
      %73 = sbr.rel (0) target = $region33
    $region32: #{tpu_custom_call.1} parent=1 // pred_region
      %s75 = ssub.s32 2048, 2048
      %76 = vsyncadd [#allocation9], %s75
      %s77 = sshll.u32 [#allocation10], 4
      %s78 = int_to_ptr.vmem [resolvable:$true] %s77
      %83 = dma.hbm_to_vmem [thread:$0]  %s7, 2048, %s78, [#allocation9], 64, 64, 4
    $region33: #{tpu_custom_call.1} parent=1 // pred_fallthru
      _
    // Predicated region
    $region34: #{tpu_custom_call.1} parent=1 // pred_check
      _
    $region35: #{tpu_custom_call.1} parent=1 // pred_check_branch
      %85 = sbr.rel (0) target = $region37
    $region36: #{tpu_custom_call.1} parent=1 // pred_region
      _
    $region37: #{tpu_custom_call.1} parent=1 // pred_fallthru
      _
    // Predicated region
    $region38: #{tpu_custom_call.1} parent=1 // pred_check
      _
    $region39: #{tpu_custom_call.1} parent=1 // pred_check_branch
      %87 = sbr.rel (0) target = $region41
    $region40: #{tpu_custom_call.1} parent=1 // pred_region
      %88 = dma.done [#allocation3], 512
    $region41: #{tpu_custom_call.1} parent=1 // pred_fallthru
      _
    // Predicated region
    $region42: #{tpu_custom_call.1} parent=1 // pred_check
      _
    $region43: #{tpu_custom_call.1} parent=1 // pred_check_branch
      %90 = sbr.rel (0) target = $region45
    $region44: #{tpu_custom_call.1} parent=1 // pred_region
      %91 = dma.done [#allocation6], 2048
    $region45: #{tpu_custom_call.1} parent=1 // pred_fallthru
      _
    // Predicated region
    $region46: #{tpu_custom_call.1} parent=1 // pred_check
      _
    $region47: #{tpu_custom_call.1} parent=1 // pred_check_branch
      %93 = sbr.rel (0) target = $region49
    $region48: #{tpu_custom_call.1} parent=1 // pred_region
      %94 = dma.done [#allocation6], 4096
    $region49: #{tpu_custom_call.1} parent=1 // pred_fallthru
      _
    // Predicated region
    $region50: #{tpu_custom_call.1} parent=1 // pred_check
      _
    $region51: #{tpu_custom_call.1} parent=1 // pred_check_branch
      %96 = sbr.rel (0) target = $region53
    $region52: #{tpu_custom_call.1} parent=1 // pred_region
      %97 = dma.done [#allocation9], 4096
    $region53: #{tpu_custom_call.1} parent=1 // pred_fallthru
      _
    // Predicated region
    $region54: #{tpu_custom_call.1} parent=1 // pred_check
      _
    $region55: #{tpu_custom_call.1} parent=1 // pred_check_branch
      %99 = sbr.rel (0) target = $region57
    $region56: #{tpu_custom_call.1} parent=1 // pred_region
      %100 = dma.done [#allocation9], 2048
    $region57: #{tpu_custom_call.1} parent=1 // pred_fallthru
      _
    %v102 = vld [vmem:[#allocation2] sm:$0xf]
    %v103 = vld [vmem:[#allocation2 + $0x4] sm:$0xf]
    %v104 = vld [vmem:[#allocation2 + $0x8] sm:$0xf]
    %v105 = vld [vmem:[#allocation2 + $0xc] sm:$0xf]
    %v106 = vld [vmem:[#allocation2 + $0x10] sm:$0xf]
    %v107 = vld [vmem:[#allocation2 + $0x14] sm:$0xf]
    %v108 = vld [vmem:[#allocation2 + $0x18] sm:$0xf]
    %v109 = vld [vmem:[#allocation2 + $0x1c] sm:$0xf]
    %v110 = vld [vmem:[#allocation5] sm:$0xff]
    %v111 = vld [vmem:[#allocation5 + $0x8] sm:$0xff]
    %v112 = vld [vmem:[#allocation5 + $0x10] sm:$0xff]
    %v113 = vld [vmem:[#allocation5 + $0x18] sm:$0xff]
    %v114 = vld [vmem:[#allocation5 + $0x20] sm:$0xff]
    %v115 = vld [vmem:[#allocation5 + $0x28] sm:$0xff]
    %v116 = vld [vmem:[#allocation5 + $0x30] sm:$0xff]
    %v117 = vld [vmem:[#allocation5 + $0x38] sm:$0xff]
    %v118 = vld [vmem:[#allocation5 + $0x40] sm:$0xff]
    %v119 = vld [vmem:[#allocation5 + $0x48] sm:$0xff]
    %v120 = vld [vmem:[#allocation5 + $0x50] sm:$0xff]
    %v121 = vld [vmem:[#allocation5 + $0x58] sm:$0xff]
    %v122 = vld [vmem:[#allocation5 + $0x60] sm:$0xff]
    %v123 = vld [vmem:[#allocation5 + $0x68] sm:$0xff]
    %v124 = vld [vmem:[#allocation5 + $0x70] sm:$0xff]
    %v125 = vld [vmem:[#allocation5 + $0x78] sm:$0xff]
    %v126 = vld [vmem:[%s2] sm:$0x3]
    %v128 = vlaneseq
    %v129 = vshrl.u32 %v128, 7
    %v130 = vsub.s32 0, %v129
    %v131 = vrot.slane %v126, %v130
    %v132 = vlaneseq
    %v133 = vshrl.u32 %v132, 7
    %v134 = vsub.s32 1, %v133
    %v135 = vrot.slane %v126, %v134
    %v146 = vunpack.c.l.b16 %v102
    %v147 = vunpack.c.l.b16 %v103
    %v148 = vunpack.c.l.b16 %v104
    %v149 = vunpack.c.l.b16 %v105
    %v150 = vunpack.c.l.b16 %v106
    %v151 = vunpack.c.l.b16 %v107
    %v152 = vunpack.c.l.b16 %v108
    %v153 = vunpack.c.l.b16 %v109
    %v154 = vpack.c.b16 %v147, %v146
    %v155 = vpack.c.b16 %v149, %v148
    %v156 = vpack.c.b16 %v151, %v150
    %v157 = vpack.c.b16 %v153, %v152
    %v178 = vunpack.c.l.b16 %v110
    %v179 = vunpack.c.h.b16 %v110
    %v180 = vunpack.c.l.b16 %v111
    %v181 = vunpack.c.h.b16 %v111
    %v182 = vunpack.c.l.b16 %v112
    %v183 = vunpack.c.h.b16 %v112
    %v184 = vunpack.c.l.b16 %v113
    %v185 = vunpack.c.h.b16 %v113
    %v186 = vunpack.c.l.b16 %v114
    %v187 = vunpack.c.h.b16 %v114
    %v188 = vunpack.c.l.b16 %v115
    %v189 = vunpack.c.h.b16 %v115
    %v190 = vunpack.c.l.b16 %v116
    %v191 = vunpack.c.h.b16 %v116
    %v192 = vunpack.c.l.b16 %v117
    %v193 = vunpack.c.h.b16 %v117
    %v194 = vunpack.c.l.b16 %v118
    %v195 = vunpack.c.h.b16 %v118
    %v196 = vunpack.c.l.b16 %v119
    %v197 = vunpack.c.h.b16 %v119
    %v198 = vunpack.c.l.b16 %v120
    %v199 = vunpack.c.h.b16 %v120
    %v200 = vunpack.c.l.b16 %v121
    %v201 = vunpack.c.h.b16 %v121
    %v202 = vunpack.c.l.b16 %v122
    %v203 = vunpack.c.h.b16 %v122
    %v204 = vunpack.c.l.b16 %v123
    %v205 = vunpack.c.h.b16 %v123
    %v206 = vunpack.c.l.b16 %v124
    %v207 = vunpack.c.h.b16 %v124
    %v208 = vunpack.c.l.b16 %v125
    %v209 = vunpack.c.h.b16 %v125
    %v210 = vpack.c.b16 %v180, %v178
    %v211 = vpack.c.b16 %v181, %v179
    %v212 = vpack.c.b16 %v184, %v182
    %v213 = vpack.c.b16 %v185, %v183
    %v214 = vpack.c.b16 %v188, %v186
    %v215 = vpack.c.b16 %v189, %v187
    %v216 = vpack.c.b16 %v192, %v190
    %v217 = vpack.c.b16 %v193, %v191
    %v218 = vpack.c.b16 %v196, %v194
    %v219 = vpack.c.b16 %v197, %v195
    %v220 = vpack.c.b16 %v200, %v198
    %v221 = vpack.c.b16 %v201, %v199
    %v222 = vpack.c.b16 %v204, %v202
    %v223 = vpack.c.b16 %v205, %v203
    %v224 = vpack.c.b16 %v208, %v206
    %v225 = vpack.c.b16 %v209, %v207
    %242 = vmatprep.subr.bf16.mxu0 %v225
    %243 = vmatpush1.bf16.msra.mxu0 %v224
    %244 = vmatprep.subr.bf16.mxu0 %v223
    %245 = vmatpush1.bf16.msra.mxu0 %v222
    %246 = vmatprep.subr.bf16.mxu0 %v221
    %247 = vmatpush1.bf16.msra.mxu0 %v220
    %248 = vmatprep.subr.bf16.mxu0 %v219
    %249 = vmatpush1.bf16.msra.mxu0 %v218
    %250 = vmatprep.subr.bf16.mxu0 %v217
    %251 = vmatpush1.bf16.msra.mxu0 %v216
    %252 = vmatprep.subr.bf16.mxu0 %v215
    %253 = vmatpush1.bf16.msra.mxu0 %v214
    %254 = vmatprep.subr.bf16.mxu0 %v213
    %255 = vmatpush1.bf16.msra.mxu0 %v212
    %256 = vmatprep.subr.bf16.mxu0 %v211
    %257 = vmatpush1.bf16.msra.mxu0 %v210
    %258 = vmatprep.subr.bf16.mxu0 0
    %259 = vmatpush2.bf16.msra.mxu0 0
    %260 = vmatprep.subr.bf16.mxu0 0
    %261 = vmatpush2.bf16.msra.mxu0 0
    %262 = vmatprep.subr.bf16.mxu0 0
    %263 = vmatpush2.bf16.msra.mxu0 0
    %264 = vmatprep.subr.bf16.mxu0 0
    %265 = vmatpush2.bf16.msra.mxu0 0
    %266 = vmatprep.subr.bf16.mxu0 0
    %267 = vmatpush2.bf16.msra.mxu0 0
    %268 = vmatprep.subr.bf16.mxu0 0
    %269 = vmatpush2.bf16.msra.mxu0 0
    %270 = vmatprep.subr.bf16.mxu0 0
    %271 = vmatpush2.bf16.msra.mxu0 0
    %272 = vmatprep.subr.bf16.mxu0 0
    %273 = vmatpush2.bf16.msra.mxu0 0
    %274 = vmatprep.mubr.bf16.mxu0 0
    %275 = vmatmul.mubr.bf16.gmra.mxu0 %v154
    %v276 = vpop.f32.mrf.mxu0
    %v277 = vadd.f32 %v131, %v276
    %v278 = vpop.f32.mrf.mxu0
    %v279 = vadd.f32 %v135, %v278
    %v280 = vpop.f32.mrf.mxu0
    %v281 = vadd.f32 %v131, %v280
    %v282 = vpop.f32.mrf.mxu0
    %v283 = vadd.f32 %v135, %v282
    %284 = vmatprep.mubr.bf16.mxu0 0
    %285 = vmatmul.mubr.bf16.gmra.mxu0 %v155
    %v286 = vpop.f32.mrf.mxu0
    %v287 = vadd.f32 %v131, %v286
    %v288 = vpop.f32.mrf.mxu0
    %v289 = vadd.f32 %v135, %v288
    %v290 = vpop.f32.mrf.mxu0
    %v291 = vadd.f32 %v131, %v290
    %v292 = vpop.f32.mrf.mxu0
    %v293 = vadd.f32 %v135, %v292
    %294 = vmatprep.mubr.bf16.mxu0 0
    %295 = vmatmul.mubr.bf16.gmra.mxu0 %v156
    %v296 = vpop.f32.mrf.mxu0
    %v297 = vadd.f32 %v131, %v296
    %v298 = vpop.f32.mrf.mxu0
    %v299 = vadd.f32 %v135, %v298
    %v300 = vpop.f32.mrf.mxu0
    %v301 = vadd.f32 %v131, %v300
    %v302 = vpop.f32.mrf.mxu0
    %v303 = vadd.f32 %v135, %v302
    %304 = vmatprep.mubr.bf16.mxu0 0
    %305 = vmatmul.mubr.bf16.gmra.mxu0 %v157
    %v306 = vpop.f32.mrf.mxu0
    %v307 = vadd.f32 %v131, %v306
    %v308 = vpop.f32.mrf.mxu0
    %v309 = vadd.f32 %v135, %v308
    %v310 = vpop.f32.mrf.mxu0
    %v311 = vadd.f32 %v131, %v310
    %v312 = vpop.f32.mrf.mxu0
    %v313 = vadd.f32 %v135, %v312
    %314 = vdwg.mxu0
    %v315 = vmax.f32 %v277, 0.0
    %v316 = vmax.f32 %v279, 0.0
    %v317 = vmax.f32 %v281, 0.0
    %v318 = vmax.f32 %v283, 0.0
    %v319 = vmax.f32 %v287, 0.0
    %v320 = vmax.f32 %v289, 0.0
    %v321 = vmax.f32 %v291, 0.0
    %v322 = vmax.f32 %v293, 0.0
    %v323 = vmax.f32 %v297, 0.0
    %v324 = vmax.f32 %v299, 0.0
    %v325 = vmax.f32 %v301, 0.0
    %v326 = vmax.f32 %v303, 0.0
    %v327 = vmax.f32 %v307, 0.0
    %v328 = vmax.f32 %v309, 0.0
    %v329 = vmax.f32 %v311, 0.0
    %v330 = vmax.f32 %v313, 0.0
    %v331 = vpack.c.bf16 %v317, %v315
    %v332 = vpack.c.bf16 %v318, %v316
    %v333 = vpack.c.bf16 %v321, %v319
    %v334 = vpack.c.bf16 %v322, %v320
    %v335 = vpack.c.bf16 %v325, %v323
    %v336 = vpack.c.bf16 %v326, %v324
    %v337 = vpack.c.bf16 %v329, %v327
    %v338 = vpack.c.bf16 %v330, %v328
    %v339 = vld [vmem:[#allocation7] sm:$0xff]
    %v340 = vld [vmem:[#allocation7 + $0x8] sm:$0xff]
    %v341 = vld [vmem:[#allocation7 + $0x10] sm:$0xff]
    %v342 = vld [vmem:[#allocation7 + $0x18] sm:$0xff]
    %v343 = vld [vmem:[#allocation7 + $0x20] sm:$0xff]
    %v344 = vld [vmem:[#allocation7 + $0x28] sm:$0xff]
    %v345 = vld [vmem:[#allocation7 + $0x30] sm:$0xff]
    %v346 = vld [vmem:[#allocation7 + $0x38] sm:$0xff]
    %v347 = vld [vmem:[#allocation7 + $0x40] sm:$0xff]
    %v348 = vld [vmem:[#allocation7 + $0x48] sm:$0xff]
    %v349 = vld [vmem:[#allocation7 + $0x50] sm:$0xff]
    %v350 = vld [vmem:[#allocation7 + $0x58] sm:$0xff]
    %v351 = vld [vmem:[#allocation7 + $0x60] sm:$0xff]
    %v352 = vld [vmem:[#allocation7 + $0x68] sm:$0xff]
    %v353 = vld [vmem:[#allocation7 + $0x70] sm:$0xff]
    %v354 = vld [vmem:[#allocation7 + $0x78] sm:$0xff]
    %v355 = vld [vmem:[#allocation7 + $0x80] sm:$0xff]
    %v356 = vld [vmem:[#allocation7 + $0x88] sm:$0xff]
    %v357 = vld [vmem:[#allocation7 + $0x90] sm:$0xff]
    %v358 = vld [vmem:[#allocation7 + $0x98] sm:$0xff]
    %v359 = vld [vmem:[#allocation7 + $0xa0] sm:$0xff]
    %v360 = vld [vmem:[#allocation7 + $0xa8] sm:$0xff]
    %v361 = vld [vmem:[#allocation7 + $0xb0] sm:$0xff]
    %v362 = vld [vmem:[#allocation7 + $0xb8] sm:$0xff]
    %v363 = vld [vmem:[#allocation7 + $0xc0] sm:$0xff]
    %v364 = vld [vmem:[#allocation7 + $0xc8] sm:$0xff]
    %v365 = vld [vmem:[#allocation7 + $0xd0] sm:$0xff]
    %v366 = vld [vmem:[#allocation7 + $0xd8] sm:$0xff]
    %v367 = vld [vmem:[#allocation7 + $0xe0] sm:$0xff]
    %v368 = vld [vmem:[#allocation7 + $0xe8] sm:$0xff]
    %v369 = vld [vmem:[#allocation7 + $0xf0] sm:$0xff]
    %v370 = vld [vmem:[#allocation7 + $0xf8] sm:$0xff]
    %v371 = vld [vmem:[%s4] sm:$0x3]
    %v373 = vlaneseq
    %v374 = vshrl.u32 %v373, 7
    %v375 = vsub.s32 0, %v374
    %v376 = vrot.slane %v371, %v375
    %v377 = vlaneseq
    %v378 = vshrl.u32 %v377, 7
    %v379 = vsub.s32 1, %v378
    %v380 = vrot.slane %v371, %v379
    %v415 = vunpack.c.l.b16 %v339
    %v416 = vunpack.c.h.b16 %v339
    %v417 = vunpack.c.l.b16 %v340
    %v418 = vunpack.c.h.b16 %v340
    %v419 = vunpack.c.l.b16 %v341
    %v420 = vunpack.c.h.b16 %v341
    %v421 = vunpack.c.l.b16 %v342
    %v422 = vunpack.c.h.b16 %v342
    %v423 = vunpack.c.l.b16 %v343
    %v424 = vunpack.c.h.b16 %v343
    %v425 = vunpack.c.l.b16 %v344
    %v426 = vunpack.c.h.b16 %v344
    %v427 = vunpack.c.l.b16 %v345
    %v428 = vunpack.c.h.b16 %v345
    %v429 = vunpack.c.l.b16 %v346
    %v430 = vunpack.c.h.b16 %v346
    %v431 = vunpack.c.l.b16 %v347
    %v432 = vunpack.c.h.b16 %v347
    %v433 = vunpack.c.l.b16 %v348
    %v434 = vunpack.c.h.b16 %v348
    %v435 = vunpack.c.l.b16 %v349
    %v436 = vunpack.c.h.b16 %v349
    %v437 = vunpack.c.l.b16 %v350
    %v438 = vunpack.c.h.b16 %v350
    %v439 = vunpack.c.l.b16 %v351
    %v440 = vunpack.c.h.b16 %v351
    %v441 = vunpack.c.l.b16 %v352
    %v442 = vunpack.c.h.b16 %v352
    %v443 = vunpack.c.l.b16 %v353
    %v444 = vunpack.c.h.b16 %v353
    %v445 = vunpack.c.l.b16 %v354
    %v446 = vunpack.c.h.b16 %v354
    %v447 = vunpack.c.l.b16 %v355
    %v448 = vunpack.c.h.b16 %v355
    %v449 = vunpack.c.l.b16 %v356
    %v450 = vunpack.c.h.b16 %v356
    %v451 = vunpack.c.l.b16 %v357
    %v452 = vunpack.c.h.b16 %v357
    %v453 = vunpack.c.l.b16 %v358
    %v454 = vunpack.c.h.b16 %v358
    %v455 = vunpack.c.l.b16 %v359
    %v456 = vunpack.c.h.b16 %v359
    %v457 = vunpack.c.l.b16 %v360
    %v458 = vunpack.c.h.b16 %v360
    %v459 = vunpack.c.l.b16 %v361
    %v460 = vunpack.c.h.b16 %v361
    %v461 = vunpack.c.l.b16 %v362
    %v462 = vunpack.c.h.b16 %v362
    %v463 = vunpack.c.l.b16 %v363
    %v464 = vunpack.c.h.b16 %v363
    %v465 = vunpack.c.l.b16 %v364
    %v466 = vunpack.c.h.b16 %v364
    %v467 = vunpack.c.l.b16 %v365
    %v468 = vunpack.c.h.b16 %v365
    %v469 = vunpack.c.l.b16 %v366
    %v470 = vunpack.c.h.b16 %v366
    %v471 = vunpack.c.l.b16 %v367
    %v472 = vunpack.c.h.b16 %v367
    %v473 = vunpack.c.l.b16 %v368
    %v474 = vunpack.c.h.b16 %v368
    %v475 = vunpack.c.l.b16 %v369
    %v476 = vunpack.c.h.b16 %v369
    %v477 = vunpack.c.l.b16 %v370
    %v478 = vunpack.c.h.b16 %v370
    %v479 = vpack.c.b16 %v417, %v415
    %v480 = vpack.c.b16 %v418, %v416
    %v481 = vpack.c.b16 %v421, %v419
    %v482 = vpack.c.b16 %v422, %v420
    %v483 = vpack.c.b16 %v425, %v423
    %v484 = vpack.c.b16 %v426, %v424
    %v485 = vpack.c.b16 %v429, %v427
    %v486 = vpack.c.b16 %v430, %v428
    %v487 = vpack.c.b16 %v433, %v431
    %v488 = vpack.c.b16 %v434, %v432
    %v489 = vpack.c.b16 %v437, %v435
    %v490 = vpack.c.b16 %v438, %v436
    %v491 = vpack.c.b16 %v441, %v439
    %v492 = vpack.c.b16 %v442, %v440
    %v493 = vpack.c.b16 %v445, %v443
    %v494 = vpack.c.b16 %v446, %v444
    %v495 = vpack.c.b16 %v449, %v447
    %v496 = vpack.c.b16 %v450, %v448
    %v497 = vpack.c.b16 %v453, %v451
    %v498 = vpack.c.b16 %v454, %v452
    %v499 = vpack.c.b16 %v457, %v455
    %v500 = vpack.c.b16 %v458, %v456
    %v501 = vpack.c.b16 %v461, %v459
    %v502 = vpack.c.b16 %v462, %v460
    %v503 = vpack.c.b16 %v465, %v463
    %v504 = vpack.c.b16 %v466, %v464
    %v505 = vpack.c.b16 %v469, %v467
    %v506 = vpack.c.b16 %v470, %v468
    %v507 = vpack.c.b16 %v473, %v471
    %v508 = vpack.c.b16 %v474, %v472
    %v509 = vpack.c.b16 %v477, %v475
    %v510 = vpack.c.b16 %v478, %v476
    %543 = vmatprep.subr.bf16.mxu0 %v494
    %544 = vmatpush1.bf16.msra.mxu0 %v493
    %545 = vmatprep.subr.bf16.mxu0 %v492
    %546 = vmatpush1.bf16.msra.mxu0 %v491
    %547 = vmatprep.subr.bf16.mxu0 %v490
    %548 = vmatpush1.bf16.msra.mxu0 %v489
    %549 = vmatprep.subr.bf16.mxu0 %v488
    %550 = vmatpush1.bf16.msra.mxu0 %v487
    %551 = vmatprep.subr.bf16.mxu0 %v486
    %552 = vmatpush1.bf16.msra.mxu0 %v485
    %553 = vmatprep.subr.bf16.mxu0 %v484
    %554 = vmatpush1.bf16.msra.mxu0 %v483
    %555 = vmatprep.subr.bf16.mxu0 %v482
    %556 = vmatpush1.bf16.msra.mxu0 %v481
    %557 = vmatprep.subr.bf16.mxu0 %v480
    %558 = vmatpush1.bf16.msra.mxu0 %v479
    %559 = vmatprep.subr.bf16.mxu0 %v510
    %560 = vmatpush2.bf16.msra.mxu0 %v509
    %561 = vmatprep.subr.bf16.mxu0 %v508
    %562 = vmatpush2.bf16.msra.mxu0 %v507
    %563 = vmatprep.subr.bf16.mxu0 %v506
    %564 = vmatpush2.bf16.msra.mxu0 %v505
    %565 = vmatprep.subr.bf16.mxu0 %v504
    %566 = vmatpush2.bf16.msra.mxu0 %v503
    %567 = vmatprep.subr.bf16.mxu0 %v502
    %568 = vmatpush2.bf16.msra.mxu0 %v501
    %569 = vmatprep.subr.bf16.mxu0 %v500
    %570 = vmatpush2.bf16.msra.mxu0 %v499
    %571 = vmatprep.subr.bf16.mxu0 %v498
    %572 = vmatpush2.bf16.msra.mxu0 %v497
    %573 = vmatprep.subr.bf16.mxu0 %v496
    %574 = vmatpush2.bf16.msra.mxu0 %v495
    %575 = vmatprep.mubr.bf16.mxu0 %v332
    %576 = vmatmul.mubr.bf16.gmra.mxu0 %v331
    %v577 = vpop.f32.mrf.mxu0
    %v578 = vadd.f32 %v376, %v577
    %v579 = vpop.f32.mrf.mxu0
    %v580 = vadd.f32 %v380, %v579
    %v581 = vpop.f32.mrf.mxu0
    %v582 = vadd.f32 %v376, %v581
    %v583 = vpop.f32.mrf.mxu0
    %v584 = vadd.f32 %v380, %v583
    %585 = vmatprep.mubr.bf16.mxu0 %v334
    %586 = vmatmul.mubr.bf16.gmra.mxu0 %v333
    %v587 = vpop.f32.mrf.mxu0
    %v588 = vadd.f32 %v376, %v587
    %v589 = vpop.f32.mrf.mxu0
    %v590 = vadd.f32 %v380, %v589
    %v591 = vpop.f32.mrf.mxu0
    %v592 = vadd.f32 %v376, %v591
    %v593 = vpop.f32.mrf.mxu0
    %v594 = vadd.f32 %v380, %v593
    %595 = vmatprep.mubr.bf16.mxu0 %v336
    %596 = vmatmul.mubr.bf16.gmra.mxu0 %v335
    %v597 = vpop.f32.mrf.mxu0
    %v598 = vadd.f32 %v376, %v597
    %v599 = vpop.f32.mrf.mxu0
    %v600 = vadd.f32 %v380, %v599
    %v601 = vpop.f32.mrf.mxu0
    %v602 = vadd.f32 %v376, %v601
    %v603 = vpop.f32.mrf.mxu0
    %v604 = vadd.f32 %v380, %v603
    %605 = vmatprep.mubr.bf16.mxu0 %v338
    %606 = vmatmul.mubr.bf16.gmra.mxu0 %v337
    %v607 = vpop.f32.mrf.mxu0
    %v608 = vadd.f32 %v376, %v607
    %v609 = vpop.f32.mrf.mxu0
    %v610 = vadd.f32 %v380, %v609
    %v611 = vpop.f32.mrf.mxu0
    %v612 = vadd.f32 %v376, %v611
    %v613 = vpop.f32.mrf.mxu0
    %v614 = vadd.f32 %v380, %v613
    %615 = vdwg.mxu0
    %v616 = vmax.f32 %v578, 0.0
    %v617 = vmax.f32 %v580, 0.0
    %v618 = vmax.f32 %v582, 0.0
    %v619 = vmax.f32 %v584, 0.0
    %v620 = vmax.f32 %v588, 0.0
    %v621 = vmax.f32 %v590, 0.0
    %v622 = vmax.f32 %v592, 0.0
    %v623 = vmax.f32 %v594, 0.0
    %v624 = vmax.f32 %v598, 0.0
    %v625 = vmax.f32 %v600, 0.0
    %v626 = vmax.f32 %v602, 0.0
    %v627 = vmax.f32 %v604, 0.0
    %v628 = vmax.f32 %v608, 0.0
    %v629 = vmax.f32 %v610, 0.0
    %v630 = vmax.f32 %v612, 0.0
    %v631 = vmax.f32 %v614, 0.0
    %v632 = vpack.c.bf16 %v618, %v616
    %v633 = vpack.c.bf16 %v619, %v617
    %v634 = vpack.c.bf16 %v622, %v620
    %v635 = vpack.c.bf16 %v623, %v621
    %v636 = vpack.c.bf16 %v626, %v624
    %v637 = vpack.c.bf16 %v627, %v625
    %v638 = vpack.c.bf16 %v630, %v628
    %v639 = vpack.c.bf16 %v631, %v629
    %v640 = vld [vmem:[#allocation8] sm:$0xff]
    %v641 = vld [vmem:[#allocation8 + $0x8] sm:$0xff]
    %v642 = vld [vmem:[#allocation8 + $0x10] sm:$0xff]
    %v643 = vld [vmem:[#allocation8 + $0x18] sm:$0xff]
    %v644 = vld [vmem:[#allocation8 + $0x20] sm:$0xff]
    %v645 = vld [vmem:[#allocation8 + $0x28] sm:$0xff]
    %v646 = vld [vmem:[#allocation8 + $0x30] sm:$0xff]
    %v647 = vld [vmem:[#allocation8 + $0x38] sm:$0xff]
    %v648 = vld [vmem:[#allocation8 + $0x40] sm:$0xff]
    %v649 = vld [vmem:[#allocation8 + $0x48] sm:$0xff]
    %v650 = vld [vmem:[#allocation8 + $0x50] sm:$0xff]
    %v651 = vld [vmem:[#allocation8 + $0x58] sm:$0xff]
    %v652 = vld [vmem:[#allocation8 + $0x60] sm:$0xff]
    %v653 = vld [vmem:[#allocation8 + $0x68] sm:$0xff]
    %v654 = vld [vmem:[#allocation8 + $0x70] sm:$0xff]
    %v655 = vld [vmem:[#allocation8 + $0x78] sm:$0xff]
    %v656 = vld [vmem:[#allocation8 + $0x80] sm:$0xff]
    %v657 = vld [vmem:[#allocation8 + $0x88] sm:$0xff]
    %v658 = vld [vmem:[#allocation8 + $0x90] sm:$0xff]
    %v659 = vld [vmem:[#allocation8 + $0x98] sm:$0xff]
    %v660 = vld [vmem:[#allocation8 + $0xa0] sm:$0xff]
    %v661 = vld [vmem:[#allocation8 + $0xa8] sm:$0xff]
    %v662 = vld [vmem:[#allocation8 + $0xb0] sm:$0xff]
    %v663 = vld [vmem:[#allocation8 + $0xb8] sm:$0xff]
    %v664 = vld [vmem:[#allocation8 + $0xc0] sm:$0xff]
    %v665 = vld [vmem:[#allocation8 + $0xc8] sm:$0xff]
    %v666 = vld [vmem:[#allocation8 + $0xd0] sm:$0xff]
    %v667 = vld [vmem:[#allocation8 + $0xd8] sm:$0xff]
    %v668 = vld [vmem:[#allocation8 + $0xe0] sm:$0xff]
    %v669 = vld [vmem:[#allocation8 + $0xe8] sm:$0xff]
    %v670 = vld [vmem:[#allocation8 + $0xf0] sm:$0xff]
    %v671 = vld [vmem:[#allocation8 + $0xf8] sm:$0xff]
    %v672 = vld [vmem:[%s6] sm:$0x3]
    %v674 = vlaneseq
    %v675 = vshrl.u32 %v674, 7
    %v676 = vsub.s32 0, %v675
    %v677 = vrot.slane %v672, %v676
    %v678 = vlaneseq
    %v679 = vshrl.u32 %v678, 7
    %v680 = vsub.s32 1, %v679
    %v681 = vrot.slane %v672, %v680
    %v716 = vunpack.c.l.b16 %v640
    %v717 = vunpack.c.h.b16 %v640
    %v718 = vunpack.c.l.b16 %v641
    %v719 = vunpack.c.h.b16 %v641
    %v720 = vunpack.c.l.b16 %v642
    %v721 = vunpack.c.h.b16 %v642
    %v722 = vunpack.c.l.b16 %v643
    %v723 = vunpack.c.h.b16 %v643
    %v724 = vunpack.c.l.b16 %v644
    %v725 = vunpack.c.h.b16 %v644
    %v726 = vunpack.c.l.b16 %v645
    %v727 = vunpack.c.h.b16 %v645
    %v728 = vunpack.c.l.b16 %v646
    %v729 = vunpack.c.h.b16 %v646
    %v730 = vunpack.c.l.b16 %v647
    %v731 = vunpack.c.h.b16 %v647
    %v732 = vunpack.c.l.b16 %v648
    %v733 = vunpack.c.h.b16 %v648
    %v734 = vunpack.c.l.b16 %v649
    %v735 = vunpack.c.h.b16 %v649
    %v736 = vunpack.c.l.b16 %v650
    %v737 = vunpack.c.h.b16 %v650
    %v738 = vunpack.c.l.b16 %v651
    %v739 = vunpack.c.h.b16 %v651
    %v740 = vunpack.c.l.b16 %v652
    %v741 = vunpack.c.h.b16 %v652
    %v742 = vunpack.c.l.b16 %v653
    %v743 = vunpack.c.h.b16 %v653
    %v744 = vunpack.c.l.b16 %v654
    %v745 = vunpack.c.h.b16 %v654
    %v746 = vunpack.c.l.b16 %v655
    %v747 = vunpack.c.h.b16 %v655
    %v748 = vunpack.c.l.b16 %v656
    %v749 = vunpack.c.h.b16 %v656
    %v750 = vunpack.c.l.b16 %v657
    %v751 = vunpack.c.h.b16 %v657
    %v752 = vunpack.c.l.b16 %v658
    %v753 = vunpack.c.h.b16 %v658
    %v754 = vunpack.c.l.b16 %v659
    %v755 = vunpack.c.h.b16 %v659
    %v756 = vunpack.c.l.b16 %v660
    %v757 = vunpack.c.h.b16 %v660
    %v758 = vunpack.c.l.b16 %v661
    %v759 = vunpack.c.h.b16 %v661
    %v760 = vunpack.c.l.b16 %v662
    %v761 = vunpack.c.h.b16 %v662
    %v762 = vunpack.c.l.b16 %v663
    %v763 = vunpack.c.h.b16 %v663
    %v764 = vunpack.c.l.b16 %v664
    %v765 = vunpack.c.h.b16 %v664
    %v766 = vunpack.c.l.b16 %v665
    %v767 = vunpack.c.h.b16 %v665
    %v768 = vunpack.c.l.b16 %v666
    %v769 = vunpack.c.h.b16 %v666
    %v770 = vunpack.c.l.b16 %v667
    %v771 = vunpack.c.h.b16 %v667
    %v772 = vunpack.c.l.b16 %v668
    %v773 = vunpack.c.h.b16 %v668
    %v774 = vunpack.c.l.b16 %v669
    %v775 = vunpack.c.h.b16 %v669
    %v776 = vunpack.c.l.b16 %v670
    %v777 = vunpack.c.h.b16 %v670
    %v778 = vunpack.c.l.b16 %v671
    %v779 = vunpack.c.h.b16 %v671
    %v780 = vpack.c.b16 %v718, %v716
    %v781 = vpack.c.b16 %v719, %v717
    %v782 = vpack.c.b16 %v722, %v720
    %v783 = vpack.c.b16 %v723, %v721
    %v784 = vpack.c.b16 %v726, %v724
    %v785 = vpack.c.b16 %v727, %v725
    %v786 = vpack.c.b16 %v730, %v728
    %v787 = vpack.c.b16 %v731, %v729
    %v788 = vpack.c.b16 %v734, %v732
    %v789 = vpack.c.b16 %v735, %v733
    %v790 = vpack.c.b16 %v738, %v736
    %v791 = vpack.c.b16 %v739, %v737
    %v792 = vpack.c.b16 %v742, %v740
    %v793 = vpack.c.b16 %v743, %v741
    %v794 = vpack.c.b16 %v746, %v744
    %v795 = vpack.c.b16 %v747, %v745
    %v796 = vpack.c.b16 %v750, %v748
    %v797 = vpack.c.b16 %v751, %v749
    %v798 = vpack.c.b16 %v754, %v752
    %v799 = vpack.c.b16 %v755, %v753
    %v800 = vpack.c.b16 %v758, %v756
    %v801 = vpack.c.b16 %v759, %v757
    %v802 = vpack.c.b16 %v762, %v760
    %v803 = vpack.c.b16 %v763, %v761
    %v804 = vpack.c.b16 %v766, %v764
    %v805 = vpack.c.b16 %v767, %v765
    %v806 = vpack.c.b16 %v770, %v768
    %v807 = vpack.c.b16 %v771, %v769
    %v808 = vpack.c.b16 %v774, %v772
    %v809 = vpack.c.b16 %v775, %v773
    %v810 = vpack.c.b16 %v778, %v776
    %v811 = vpack.c.b16 %v779, %v777
    %844 = vmatprep.subr.bf16.mxu0 %v795
    %845 = vmatpush1.bf16.msra.mxu0 %v794
    %846 = vmatprep.subr.bf16.mxu0 %v793
    %847 = vmatpush1.bf16.msra.mxu0 %v792
    %848 = vmatprep.subr.bf16.mxu0 %v791
    %849 = vmatpush1.bf16.msra.mxu0 %v790
    %850 = vmatprep.subr.bf16.mxu0 %v789
    %851 = vmatpush1.bf16.msra.mxu0 %v788
    %852 = vmatprep.subr.bf16.mxu0 %v787
    %853 = vmatpush1.bf16.msra.mxu0 %v786
    %854 = vmatprep.subr.bf16.mxu0 %v785
    %855 = vmatpush1.bf16.msra.mxu0 %v784
    %856 = vmatprep.subr.bf16.mxu0 %v783
    %857 = vmatpush1.bf16.msra.mxu0 %v782
    %858 = vmatprep.subr.bf16.mxu0 %v781
    %859 = vmatpush1.bf16.msra.mxu0 %v780
    %860 = vmatprep.subr.bf16.mxu0 %v811
    %861 = vmatpush2.bf16.msra.mxu0 %v810
    %862 = vmatprep.subr.bf16.mxu0 %v809
    %863 = vmatpush2.bf16.msra.mxu0 %v808
    %864 = vmatprep.subr.bf16.mxu0 %v807
    %865 = vmatpush2.bf16.msra.mxu0 %v806
    %866 = vmatprep.subr.bf16.mxu0 %v805
    %867 = vmatpush2.bf16.msra.mxu0 %v804
    %868 = vmatprep.subr.bf16.mxu0 %v803
    %869 = vmatpush2.bf16.msra.mxu0 %v802
    %870 = vmatprep.subr.bf16.mxu0 %v801
    %871 = vmatpush2.bf16.msra.mxu0 %v800
    %872 = vmatprep.subr.bf16.mxu0 %v799
    %873 = vmatpush2.bf16.msra.mxu0 %v798
    %874 = vmatprep.subr.bf16.mxu0 %v797
    %875 = vmatpush2.bf16.msra.mxu0 %v796
    %876 = vmatprep.mubr.bf16.mxu0 %v633
    %877 = vmatmul.mubr.bf16.gmra.mxu0 %v632
    %v878 = vpop.f32.mrf.mxu0
    %v879 = vadd.f32 %v677, %v878
    %v880 = vpop.f32.mrf.mxu0
    %v881 = vadd.f32 %v681, %v880
    %v882 = vpop.f32.mrf.mxu0
    %v883 = vadd.f32 %v677, %v882
    %v884 = vpop.f32.mrf.mxu0
    %v885 = vadd.f32 %v681, %v884
    %886 = vmatprep.mubr.bf16.mxu0 %v635
    %887 = vmatmul.mubr.bf16.gmra.mxu0 %v634
    %v888 = vpop.f32.mrf.mxu0
    %v889 = vadd.f32 %v677, %v888
    %v890 = vpop.f32.mrf.mxu0
    %v891 = vadd.f32 %v681, %v890
    %v892 = vpop.f32.mrf.mxu0
    %v893 = vadd.f32 %v677, %v892
    %v894 = vpop.f32.mrf.mxu0
    %v895 = vadd.f32 %v681, %v894
    %896 = vmatprep.mubr.bf16.mxu0 %v637
    %897 = vmatmul.mubr.bf16.gmra.mxu0 %v636
    %v898 = vpop.f32.mrf.mxu0
    %v899 = vadd.f32 %v677, %v898
    %v900 = vpop.f32.mrf.mxu0
    %v901 = vadd.f32 %v681, %v900
    %v902 = vpop.f32.mrf.mxu0
    %v903 = vadd.f32 %v677, %v902
    %v904 = vpop.f32.mrf.mxu0
    %v905 = vadd.f32 %v681, %v904
    %906 = vmatprep.mubr.bf16.mxu0 %v639
    %907 = vmatmul.mubr.bf16.gmra.mxu0 %v638
    %v908 = vpop.f32.mrf.mxu0
    %v909 = vadd.f32 %v677, %v908
    %v910 = vpop.f32.mrf.mxu0
    %v911 = vadd.f32 %v681, %v910
    %v912 = vpop.f32.mrf.mxu0
    %v913 = vadd.f32 %v677, %v912
    %v914 = vpop.f32.mrf.mxu0
    %v915 = vadd.f32 %v681, %v914
    %916 = vdwg.mxu0
    %v917 = vmax.f32 %v879, 0.0
    %v918 = vmax.f32 %v881, 0.0
    %v919 = vmax.f32 %v883, 0.0
    %v920 = vmax.f32 %v885, 0.0
    %v921 = vmax.f32 %v889, 0.0
    %v922 = vmax.f32 %v891, 0.0
    %v923 = vmax.f32 %v893, 0.0
    %v924 = vmax.f32 %v895, 0.0
    %v925 = vmax.f32 %v899, 0.0
    %v926 = vmax.f32 %v901, 0.0
    %v927 = vmax.f32 %v903, 0.0
    %v928 = vmax.f32 %v905, 0.0
    %v929 = vmax.f32 %v909, 0.0
    %v930 = vmax.f32 %v911, 0.0
    %v931 = vmax.f32 %v913, 0.0
    %v932 = vmax.f32 %v915, 0.0
    %v933 = vpack.c.bf16 %v919, %v917
    %v934 = vpack.c.bf16 %v920, %v918
    %v935 = vpack.c.bf16 %v923, %v921
    %v936 = vpack.c.bf16 %v924, %v922
    %v937 = vpack.c.bf16 %v927, %v925
    %v938 = vpack.c.bf16 %v928, %v926
    %v939 = vpack.c.bf16 %v931, %v929
    %v940 = vpack.c.bf16 %v932, %v930
    %v941 = vld [vmem:[#allocation10] sm:$0xf]
    %v942 = vld [vmem:[#allocation10 + $0x4] sm:$0xf]
    %v943 = vld [vmem:[#allocation10 + $0x8] sm:$0xf]
    %v944 = vld [vmem:[#allocation10 + $0xc] sm:$0xf]
    %v945 = vld [vmem:[#allocation10 + $0x10] sm:$0xf]
    %v946 = vld [vmem:[#allocation10 + $0x14] sm:$0xf]
    %v947 = vld [vmem:[#allocation10 + $0x18] sm:$0xf]
    %v948 = vld [vmem:[#allocation10 + $0x1c] sm:$0xf]
    %v949 = vld [vmem:[#allocation10 + $0x20] sm:$0xf]
    %v950 = vld [vmem:[#allocation10 + $0x24] sm:$0xf]
    %v951 = vld [vmem:[#allocation10 + $0x28] sm:$0xf]
    %v952 = vld [vmem:[#allocation10 + $0x2c] sm:$0xf]
    %v953 = vld [vmem:[#allocation10 + $0x30] sm:$0xf]
    %v954 = vld [vmem:[#allocation10 + $0x34] sm:$0xf]
    %v955 = vld [vmem:[#allocation10 + $0x38] sm:$0xf]
    %v956 = vld [vmem:[#allocation10 + $0x3c] sm:$0xf]
    %v957 = vld [vmem:[#allocation10 + $0x40] sm:$0xf]
    %v958 = vld [vmem:[#allocation10 + $0x44] sm:$0xf]
    %v959 = vld [vmem:[#allocation10 + $0x48] sm:$0xf]
    %v960 = vld [vmem:[#allocation10 + $0x4c] sm:$0xf]
    %v961 = vld [vmem:[#allocation10 + $0x50] sm:$0xf]
    %v962 = vld [vmem:[#allocation10 + $0x54] sm:$0xf]
    %v963 = vld [vmem:[#allocation10 + $0x58] sm:$0xf]
    %v964 = vld [vmem:[#allocation10 + $0x5c] sm:$0xf]
    %v965 = vld [vmem:[#allocation10 + $0x60] sm:$0xf]
    %v966 = vld [vmem:[#allocation10 + $0x64] sm:$0xf]
    %v967 = vld [vmem:[#allocation10 + $0x68] sm:$0xf]
    %v968 = vld [vmem:[#allocation10 + $0x6c] sm:$0xf]
    %v969 = vld [vmem:[#allocation10 + $0x70] sm:$0xf]
    %v970 = vld [vmem:[#allocation10 + $0x74] sm:$0xf]
    %v971 = vld [vmem:[#allocation10 + $0x78] sm:$0xf]
    %v972 = vld [vmem:[#allocation10 + $0x7c] sm:$0xf]
    %v973 = vld [vmem:[%s8] sm:$0x1]
    %v975 = vlaneseq
    %v976 = vshrl.u32 %v975, 7
    %v977 = vsub.s32 0, %v976
    %v978 = vrot.slane %v973, %v977
    %v1012 = vunpack.c.l.b16 %v941
    %v1013 = vunpack.c.l.b16 %v942
    %v1014 = vunpack.c.l.b16 %v943
    %v1015 = vunpack.c.l.b16 %v944
    %v1016 = vunpack.c.l.b16 %v945
    %v1017 = vunpack.c.l.b16 %v946
    %v1018 = vunpack.c.l.b16 %v947
    %v1019 = vunpack.c.l.b16 %v948
    %v1020 = vunpack.c.l.b16 %v949
    %v1021 = vunpack.c.l.b16 %v950
    %v1022 = vunpack.c.l.b16 %v951
    %v1023 = vunpack.c.l.b16 %v952
    %v1024 = vunpack.c.l.b16 %v953
    %v1025 = vunpack.c.l.b16 %v954
    %v1026 = vunpack.c.l.b16 %v955
    %v1027 = vunpack.c.l.b16 %v956
    %v1028 = vunpack.c.l.b16 %v957
    %v1029 = vunpack.c.l.b16 %v958
    %v1030 = vunpack.c.l.b16 %v959
    %v1031 = vunpack.c.l.b16 %v960
    %v1032 = vunpack.c.l.b16 %v961
    %v1033 = vunpack.c.l.b16 %v962
    %v1034 = vunpack.c.l.b16 %v963
    %v1035 = vunpack.c.l.b16 %v964
    %v1036 = vunpack.c.l.b16 %v965
    %v1037 = vunpack.c.l.b16 %v966
    %v1038 = vunpack.c.l.b16 %v967
    %v1039 = vunpack.c.l.b16 %v968
    %v1040 = vunpack.c.l.b16 %v969
    %v1041 = vunpack.c.l.b16 %v970
    %v1042 = vunpack.c.l.b16 %v971
    %v1043 = vunpack.c.l.b16 %v972
    %v1044 = vpack.c.b16 %v1013, %v1012
    %v1045 = vpack.c.b16 %v1015, %v1014
    %v1046 = vpack.c.b16 %v1017, %v1016
    %v1047 = vpack.c.b16 %v1019, %v1018
    %v1048 = vpack.c.b16 %v1021, %v1020
    %v1049 = vpack.c.b16 %v1023, %v1022
    %v1050 = vpack.c.b16 %v1025, %v1024
    %v1051 = vpack.c.b16 %v1027, %v1026
    %v1052 = vpack.c.b16 %v1029, %v1028
    %v1053 = vpack.c.b16 %v1031, %v1030
    %v1054 = vpack.c.b16 %v1033, %v1032
    %v1055 = vpack.c.b16 %v1035, %v1034
    %v1056 = vpack.c.b16 %v1037, %v1036
    %v1057 = vpack.c.b16 %v1039, %v1038
    %v1058 = vpack.c.b16 %v1041, %v1040
    %v1059 = vpack.c.b16 %v1043, %v1042
    %1076 = vmatprep.subr.bf16.mxu0 0
    %1077 = vmatpush1.bf16.msra.mxu0 %v1051
    %1078 = vmatprep.subr.bf16.mxu0 0
    %1079 = vmatpush1.bf16.msra.mxu0 %v1050
    %1080 = vmatprep.subr.bf16.mxu0 0
    %1081 = vmatpush1.bf16.msra.mxu0 %v1049
    %1082 = vmatprep.subr.bf16.mxu0 0
    %1083 = vmatpush1.bf16.msra.mxu0 %v1048
    %1084 = vmatprep.subr.bf16.mxu0 0
    %1085 = vmatpush1.bf16.msra.mxu0 %v1047
    %1086 = vmatprep.subr.bf16.mxu0 0
    %1087 = vmatpush1.bf16.msra.mxu0 %v1046
    %1088 = vmatprep.subr.bf16.mxu0 0
    %1089 = vmatpush1.bf16.msra.mxu0 %v1045
    %1090 = vmatprep.subr.bf16.mxu0 0
    %1091 = vmatpush1.bf16.msra.mxu0 %v1044
    %1092 = vmatprep.subr.bf16.mxu0 0
    %1093 = vmatpush2.bf16.msra.mxu0 %v1059
    %1094 = vmatprep.subr.bf16.mxu0 0
    %1095 = vmatpush2.bf16.msra.mxu0 %v1058
    %1096 = vmatprep.subr.bf16.mxu0 0
    %1097 = vmatpush2.bf16.msra.mxu0 %v1057
    %1098 = vmatprep.subr.bf16.mxu0 0
    %1099 = vmatpush2.bf16.msra.mxu0 %v1056
    %1100 = vmatprep.subr.bf16.mxu0 0
    %1101 = vmatpush2.bf16.msra.mxu0 %v1055
    %1102 = vmatprep.subr.bf16.mxu0 0
    %1103 = vmatpush2.bf16.msra.mxu0 %v1054
    %1104 = vmatprep.subr.bf16.mxu0 0
    %1105 = vmatpush2.bf16.msra.mxu0 %v1053
    %1106 = vmatprep.subr.bf16.mxu0 0
    %1107 = vmatpush2.bf16.msra.mxu0 %v1052
    %1108 = vmatprep.mubr.bf16.mxu0 %v934
    %1109 = vmatmul.mubr.bf16.gmra.mxu0 %v933
    %v1110 = vpop.f32.mrf.mxu0
    %v1111 = vadd.f32 %v978, %v1110
    %v1112 = vpop.f32.mrf.mxu0
    %v1113 = vpop.f32.mrf.mxu0
    %v1114 = vadd.f32 %v978, %v1113
    %v1115 = vpop.f32.mrf.mxu0
    %1116 = vmatprep.mubr.bf16.mxu0 %v936
    %1117 = vmatmul.mubr.bf16.gmra.mxu0 %v935
    %v1118 = vpop.f32.mrf.mxu0
    %v1119 = vadd.f32 %v978, %v1118
    %v1120 = vpop.f32.mrf.mxu0
    %v1121 = vpop.f32.mrf.mxu0
    %v1122 = vadd.f32 %v978, %v1121
    %v1123 = vpop.f32.mrf.mxu0
    %1124 = vmatprep.mubr.bf16.mxu0 %v938
    %1125 = vmatmul.mubr.bf16.gmra.mxu0 %v937
    %v1126 = vpop.f32.mrf.mxu0
    %v1127 = vadd.f32 %v978, %v1126
    %v1128 = vpop.f32.mrf.mxu0
    %v1129 = vpop.f32.mrf.mxu0
    %v1130 = vadd.f32 %v978, %v1129
    %v1131 = vpop.f32.mrf.mxu0
    %1132 = vmatprep.mubr.bf16.mxu0 %v940
    %1133 = vmatmul.mubr.bf16.gmra.mxu0 %v939
    %v1134 = vpop.f32.mrf.mxu0
    %v1135 = vadd.f32 %v978, %v1134
    %v1136 = vpop.f32.mrf.mxu0
    %v1137 = vpop.f32.mrf.mxu0
    %v1138 = vadd.f32 %v978, %v1137
    %v1139 = vpop.f32.mrf.mxu0
    %1140 = vdwg.mxu0
    %1141 = vst [vmem:[#allocation11] sm:$0xff] %v1111
    %1142 = vst [vmem:[#allocation11 + $0x8] sm:$0xff] %v1114
    %1143 = vst [vmem:[#allocation11 + $0x10] sm:$0xff] %v1119
    %1144 = vst [vmem:[#allocation11 + $0x18] sm:$0xff] %v1122
    %1145 = vst [vmem:[#allocation11 + $0x20] sm:$0xff] %v1127
    %1146 = vst [vmem:[#allocation11 + $0x28] sm:$0xff] %v1130
    %1147 = vst [vmem:[#allocation11 + $0x30] sm:$0xff] %v1135
    %1148 = vst [vmem:[#allocation11 + $0x38] sm:$0xff] %v1138
    // Predicated region
    $region58: #{tpu_custom_call.1} parent=1 // pred_check
      _
    $region59: #{tpu_custom_call.1} parent=1 // pred_check_branch
      %1150 = sbr.rel (0) target = $region61
    $region60: #{tpu_custom_call.1} parent=1 // pred_region
      %s1152 = ssub.s32 1024, 1024
      %1153 = vsyncadd [#allocation4], %s1152
      %s1154 = sshll.u32 [#allocation11], 4
      %s1155 = int_to_ptr.vmem [resolvable:$true] %s1154
      %1160 = dma.vmem_to_hbm [thread:$0]  %s1155, 1024, %s9, [#allocation4], 128, 128, 8
    $region61: #{tpu_custom_call.1} parent=1 // pred_fallthru
      _
    // Predicated region
    $region62: #{tpu_custom_call.1} parent=1 // pred_check
      _
    $region63: #{tpu_custom_call.1} parent=1 // pred_check_branch
      %1162 = sbr.rel (0) target = $region65
    $region64: #{tpu_custom_call.1} parent=1 // pred_region
      %1163 = dma.done [#allocation4], 1024
    $region65: #{tpu_custom_call.1} parent=1 // pred_fallthru
      _
    %1164 = vsyncpa [#allocation3], 1
    %1165 = vsyncpa [#allocation6], 1
    %1166 = vsyncpa [#allocation9], 1
    %1167 = vsyncpa [#allocation4], 1

</llo_original>
